<compile_context>
chip_gen: v5e
topology: v5e:2x2
jax: 0.10.0
libtpu: 0.0.40
codegen_flags: <defaults>
</compile_context>

<pallas_src>
from functools import partial

import jax
import jax.numpy as jnp
from jax import lax
from jax.experimental import pallas as pl
from jax.experimental.pallas import tpu as pltpu


def _pair(v):
    if isinstance(v, (tuple, list)):
        return (int(v[0]), int(v[0])) if len(v) == 1 else (int(v[0]), int(v[1]))
    return int(v), int(v)


def _same_pad(size, k, s):
    # Same formula as the PyTorch module (integer ceil == math.ceil for +ints).
    extra = ((size + s - 1) // s - 1) * s - size + k
    # TODO(synk): kernel_size < stride would give negative padding (F.pad crops);
    # not used in practice and unsupported here.
    assert extra >= 0, "kernel_size < stride (negative 'same' padding) unsupported"
    lo = extra // 2
    return lo, extra - lo


def _ds(start, size, stride):
    return pl.ds(start, size) if stride == 1 else pl.ds(start, size, stride)


def _make_maxpool_kernel(*, H, W, kh, kw, sh, sw, top, bottom, left, Wo, TH, T):
    """Kernel body for one (batch, output-row-tile) grid step."""
    RH = (TH - 1) * sh + kh          # padded input rows consumed by one tile
    body = RH - top - bottom         # rows of real data needed by *every* tile

    def kernel(x_ref, o_ref, pad_ref, row_ref):
        t = pl.program_id(1)
        p0 = pl.multiple_of(t * (TH * sh), TH * sh)   # first padded row of tile

        # ---- build the zero-padded halo tile in VMEM (no host-side jnp.pad) ----
        pad_ref[...] = jnp.zeros_like(pad_ref)
        # rows valid for every tile: padded rows [p0+top, p0+RH-bottom)
        pad_ref[pl.ds(top, body), pl.ds(left, W), :] = (
            x_ref[0, pl.ds(p0, body), :, :])
        if top > 0 and T > 1:
            @pl.when(t > 0)          # tile 0 keeps these rows as zero padding
            def _():
                pad_ref[pl.ds(0, top), pl.ds(left, W), :] = (
                    x_ref[0, pl.ds(p0 - top, top), :, :])
        if bottom > 0 and T > 1:
            @pl.when(t < T - 1)      # last tile keeps these rows as zero padding
            def _():
                pad_ref[pl.ds(RH - bottom, bottom), pl.ds(left, W), :] = (
                    x_ref[0, pl.ds(p0 + body, bottom), :, :])

        # ---- vertical kh-tap max, stride sh along rows (full padded width) ----
        vm = pad_ref[_ds(0, TH, sh), :, :]
        for dy in range(1, kh):
            vm = jnp.maximum(vm, pad_ref[_ds(dy, TH, sh), :, :])
        row_ref[...] = vm

        # ---- horizontal kw-tap max, stride sw along columns ----
        hm = row_ref[:, _ds(0, Wo, sw), :]
        for dx in range(1, kw):
            hm = jnp.maximum(hm, row_ref[:, _ds(dx, Wo, sw), :])
        o_ref[0, :, :, :] = hm

    return kernel, RH


def maxpool2d_static_same(x, kernel_size=3, stride=2, *, max_tile_rows=128,
                          vmem_limit_bytes=None):
    """NHWC MaxPool2dStaticSamePadding(kernel_size, stride) as one Pallas kernel."""
    kh, kw = _pair(kernel_size)
    sh, sw = _pair(stride)
    N, H, W, C = x.shape
    top, bottom = _same_pad(H, kh, sh)
    left, right = _same_pad(W, kw, sw)
    Hp, Wp = H + top + bottom, W + left + right
    Ho, Wo = (Hp - kh) // sh + 1, (Wp - kw) // sw + 1

    # Output-row tile: largest divisor of Ho <= max_tile_rows whose halo-copy
    # arithmetic stays in-bounds when multi-tiled (TH*sh >= top/bottom).
    TH = Ho
    for cand in range(min(Ho, max(1, max_tile_rows)), 0, -1):
        if Ho % cand == 0 and (cand == Ho or cand * sh >= max(top, bottom, 1)):
            TH = cand
            break
    T = Ho // TH

    kernel, RH = _make_maxpool_kernel(H=H, W=W, kh=kh, kw=kw, sh=sh, sw=sw,
                                      top=top, bottom=bottom, left=left,
                                      Wo=Wo, TH=TH, T=T)

    bpe = jnp.dtype(x.dtype).itemsize
    est = (2 * H * W * C            # double-buffered input block
           + RH * Wp * C            # padded halo scratch
           + TH * Wp * C            # row-max scratch
           + 2 * TH * Wo * C) * bpe  # double-buffered output block
    if vmem_limit_bytes is None:
        vmem_limit_bytes = int(min(max(2 * est, 32 * 1024 * 1024),
                                   64 * 1024 * 1024))   # stay under v7x 64 MiB

    return pl.pallas_call(
        kernel,
        out_shape=jax.ShapeDtypeStruct((N, Ho, Wo, C), x.dtype),
        grid_spec=pltpu.PrefetchScalarGridSpec(
            num_scalar_prefetch=0,
            grid=(N, T),
            # Full feature map per batch element; block index is constant along
            # the row-tile axis so it is fetched once per n and reused.
            # TODO(synk): for very large feature maps, halo-DMA input row tiles
            # from HBM (pl.ANY + pltpu.make_async_copy) instead of whole images.
            in_specs=[pl.BlockSpec((1, H, W, C), lambda n, t: (n, 0, 0, 0))],
            out_specs=pl.BlockSpec((1, TH, Wo, C), lambda n, t: (n, t, 0, 0)),
            scratch_shapes=[pltpu.VMEM((RH, Wp, C), x.dtype),
                            pltpu.VMEM((TH, Wp, C), x.dtype)],
        ),
        compiler_params=pltpu.CompilerParams(
            dimension_semantics=("parallel", "parallel"),
            vmem_limit_bytes=vmem_limit_bytes),
    )(x)


def maxpool2d_static_same_nchw(x, kernel_size=3, stride=2, **kwargs):
    """PyTorch-layout (NCHW) entry point.  Production callers should stay NHWC
    (channels -> lanes) to avoid the layout transposes."""
    y = maxpool2d_static_same(jnp.transpose(x, (0, 2, 3, 1)),
                              kernel_size, stride, **kwargs)
    return jnp.transpose(y, (0, 3, 1, 2))


# ----------------------------------------------------------------------------
# Pure-JAX reference (zero-pad, then VALID max pool) for correctness checks.
# ----------------------------------------------------------------------------
def _reference_nhwc(x, kernel_size, stride):
    kh, kw = _pair(kernel_size)
    sh, sw = _pair(stride)
    _, H, W, _ = x.shape
    top, bottom = _same_pad(H, kh, sh)
    left, right = _same_pad(W, kw, sw)
    xp = jnp.pad(x, ((0, 0), (top, bottom), (left, right), (0, 0)))
    return lax.reduce_window(xp, jnp.array(-jnp.inf, x.dtype), lax.max,
                             (1, kh, kw, 1), (1, sh, sw, 1), 'VALID')


if __name__ == "__main__":
    key = jax.random.PRNGKey(0)

    # (N, H, W, C, kernel_size, stride, max_tile_rows)
    cases = [
        (2, 16, 16, 128, 3, 2, 2),    # even H/W, lane-dense C, 4 row tiles/batch
        (1, 15, 17, 64, 3, 2, 2),     # odd H/W -> asymmetric 'same' padding
        (2, 16, 16, 128, 3, 2, 128),  # single-tile path
        (1, 16, 16, 128, 2, 2, 128),  # kernel=2 -> zero 'same' padding branch
    ]
    for i, (N, H, W, C, k, s, mtr) in enumerate(cases):
        key, sub = jax.random.split(key)
        x = jax.random.normal(sub, (N, H, W, C), jnp.float32)
        fwd = jax.jit(partial(maxpool2d_static_same, kernel_size=k, stride=s,
                              max_tile_rows=mtr))
        out = jax.block_until_ready(fwd(x))
        ref = _reference_nhwc(x, k, s)
        assert out.shape == ref.shape, (i, out.shape, ref.shape)
        assert bool(jnp.allclose(out, ref)), f"case {i}: mismatch vs reference"

    # PyTorch-layout (NCHW) entry point, matching the original module signature.
    key, sub = jax.random.split(key)
    x_nchw = jax.random.normal(sub, (2, 32, 16, 16), jnp.float32)
    out_nchw = jax.block_until_ready(maxpool2d_static_same_nchw(x_nchw, 3, 2))
    ref_nchw = jnp.transpose(
        _reference_nhwc(jnp.transpose(x_nchw, (0, 2, 3, 1)), 3, 2), (0, 3, 1, 2))
    assert bool(jnp.allclose(out_nchw, ref_nchw))

    print("KERNEL_OK")
</pallas_src>

<mosaic_0001>
module attributes {stable_mosaic.version = 11 : i64} {
  func.func @kernel(%arg0: i32, %arg1: i32, %arg2: memref<1x16x16x128xf32, #tpu.memory_space<vmem>>, %arg3: memref<1x2x8x128xf32, #tpu.memory_space<vmem>>, %arg4: memref<5x17x128xf32, #tpu.memory_space<vmem>>, %arg5: memref<2x17x128xf32, #tpu.memory_space<vmem>>) attributes {dimension_semantics = [#tpu.dimension_semantics<parallel>, #tpu.dimension_semantics<parallel>], iteration_bounds = array<i64: 2, 4>, scalar_prefetch = 0 : i64, scratch_operands = 2 : i64, tpu.core_type = #tpu.core_type<tc>, window_params = [{transform_indices = @transform_0, window_bounds = array<i64: 1, 16, 16, 128>}, {transform_indices = @transform_1, window_bounds = array<i64: 1, 2, 8, 128>}]} {
    %c4_i32 = arith.constant 4 : i32
    %0 = arith.muli %arg1, %c4_i32 : i32
    %1 = tpu.assume_multiple %0, 4 : i32
    %cst = arith.constant 0.000000e+00 : f32
    %2 = vector.broadcast %cst : f32 to vector<5x17x128xf32>
    %c0 = arith.constant 0 : index
    %c0_0 = arith.constant 0 : index
    %c0_1 = arith.constant 0 : index
    %3 = vector.load %arg4[%c0, %c0_0, %c0_1] : memref<5x17x128xf32, #tpu.memory_space<vmem>>, vector<5x17x128xf32>
    tpu.vector_store %arg4[%c0, %c0_0, %c0_1], %2 {strides = array<i32>} : memref<5x17x128xf32, #tpu.memory_space<vmem>>, vector<5x17x128xf32>,
    %c0_2 = arith.constant 0 : index
    %4 = arith.index_cast %1 : i32 to index
    %c0_3 = arith.constant 0 : index
    %c0_4 = arith.constant 0 : index
    %5 = vector.load %arg2[%c0_2, %4, %c0_3, %c0_4] : memref<1x16x16x128xf32, #tpu.memory_space<vmem>>, vector<1x4x16x128xf32>
    %6 = vector.shape_cast %5 : vector<1x4x16x128xf32> to vector<4x16x128xf32>
    %c0_5 = arith.constant 0 : index
    %c0_6 = arith.constant 0 : index
    %c0_7 = arith.constant 0 : index
    %7 = vector.load %arg4[%c0_5, %c0_6, %c0_7] : memref<5x17x128xf32, #tpu.memory_space<vmem>>, vector<4x16x128xf32>
    tpu.vector_store %arg4[%c0_5, %c0_6, %c0_7], %6 {strides = array<i32>} : memref<5x17x128xf32, #tpu.memory_space<vmem>>, vector<4x16x128xf32>,
    %c3_i32 = arith.constant 3 : i32
    %8 = arith.cmpi slt, %arg1, %c3_i32 : i32
    %9 = arith.extui %8 : i1 to i32
    %c0_i32 = arith.constant 0 : i32
    %10 = arith.cmpi ne, %9, %c0_i32 : i32
    scf.if %10 {
      %c4_i32_31 = arith.constant 4 : i32
      %25 = arith.addi %1, %c4_i32_31 : i32
      %c0_32 = arith.constant 0 : index
      %26 = arith.index_cast %25 : i32 to index
      %c0_33 = arith.constant 0 : index
      %c0_34 = arith.constant 0 : index
      %27 = vector.load %arg2[%c0_32, %26, %c0_33, %c0_34] : memref<1x16x16x128xf32, #tpu.memory_space<vmem>>, vector<1x1x16x128xf32>
      %28 = vector.shape_cast %27 : vector<1x1x16x128xf32> to vector<1x16x128xf32>
      %c4 = arith.constant 4 : index
      %c0_35 = arith.constant 0 : index
      %c0_36 = arith.constant 0 : index
      %29 = vector.load %arg4[%c4, %c0_35, %c0_36] : memref<5x17x128xf32, #tpu.memory_space<vmem>>, vector<1x16x128xf32>
      tpu.vector_store %arg4[%c4, %c0_35, %c0_36], %28 {strides = array<i32>} : memref<5x17x128xf32, #tpu.memory_space<vmem>>, vector<1x16x128xf32>,
    } else {
    }
    %c0_8 = arith.constant 0 : index
    %c0_9 = arith.constant 0 : index
    %c0_10 = arith.constant 0 : index
    %11 = tpu.strided_load %arg4[%c0_8, %c0_9, %c0_10] {strides = array<i32: 2, 1, 1>} : memref<5x17x128xf32, #tpu.memory_space<vmem>>, vector<2x17x128xf32>
    %c1 = arith.constant 1 : index
    %c0_11 = arith.constant 0 : index
    %c0_12 = arith.constant 0 : index
    %12 = tpu.strided_load %arg4[%c1, %c0_11, %c0_12] {strides = array<i32: 2, 1, 1>} : memref<5x17x128xf32, #tpu.memory_space<vmem>>, vector<2x17x128xf32>
    %13 = arith.maximumf %11, %12 : vector<2x17x128xf32>
    %c2 = arith.constant 2 : index
    %c0_13 = arith.constant 0 : index
    %c0_14 = arith.constant 0 : index
    %14 = tpu.strided_load %arg4[%c2, %c0_13, %c0_14] {strides = array<i32: 2, 1, 1>} : memref<5x17x128xf32, #tpu.memory_space<vmem>>, vector<2x17x128xf32>
    %15 = arith.maximumf %13, %14 : vector<2x17x128xf32>
    %c0_15 = arith.constant 0 : index
    %c0_16 = arith.constant 0 : index
    %c0_17 = arith.constant 0 : index
    %16 = vector.load %arg5[%c0_15, %c0_16, %c0_17] : memref<2x17x128xf32, #tpu.memory_space<vmem>>, vector<2x17x128xf32>
    tpu.vector_store %arg5[%c0_15, %c0_16, %c0_17], %15 {strides = array<i32>} : memref<2x17x128xf32, #tpu.memory_space<vmem>>, vector<2x17x128xf32>,
    %c0_18 = arith.constant 0 : index
    %c0_19 = arith.constant 0 : index
    %c0_20 = arith.constant 0 : index
    %17 = tpu.strided_load %arg5[%c0_18, %c0_19, %c0_20] {strides = array<i32: 1, 2, 1>} : memref<2x17x128xf32, #tpu.memory_space<vmem>>, vector<2x8x128xf32>
    %c0_21 = arith.constant 0 : index
    %c1_22 = arith.constant 1 : index
    %c0_23 = arith.constant 0 : index
    %18 = tpu.strided_load %arg5[%c0_21, %c1_22, %c0_23] {strides = array<i32: 1, 2, 1>} : memref<2x17x128xf32, #tpu.memory_space<vmem>>, vector<2x8x128xf32>
    %19 = arith.maximumf %17, %18 : vector<2x8x128xf32>
    %c0_24 = arith.constant 0 : index
    %c2_25 = arith.constant 2 : index
    %c0_26 = arith.constant 0 : index
    %20 = tpu.strided_load %arg5[%c0_24, %c2_25, %c0_26] {strides = array<i32: 1, 2, 1>} : memref<2x17x128xf32, #tpu.memory_space<vmem>>, vector<2x8x128xf32>
    %21 = arith.maximumf %19, %20 : vector<2x8x128xf32>
    %c0_27 = arith.constant 0 : index
    %c0_28 = arith.constant 0 : index
    %c0_29 = arith.constant 0 : index
    %c0_30 = arith.constant 0 : index
    %22 = vector.load %arg3[%c0_27, %c0_28, %c0_29, %c0_30] : memref<1x2x8x128xf32, #tpu.memory_space<vmem>>, vector<1x2x8x128xf32>
    %23 = vector.shape_cast %22 : vector<1x2x8x128xf32> to vector<2x8x128xf32>
    %24 = vector.shape_cast %21 : vector<2x8x128xf32> to vector<1x2x8x128xf32>
    tpu.vector_store %arg3[%c0_27, %c0_28, %c0_29, %c0_30], %24 {strides = array<i32>} : memref<1x2x8x128xf32, #tpu.memory_space<vmem>>, vector<1x2x8x128xf32>,
    return
  }
  func.func @transform_0(%arg0: i32, %arg1: i32) -> (i32, i32, i32, i32) {
    %c0_i32 = arith.constant 0 : i32
    %c0_i32_0 = arith.constant 0 : i32
    %c0_i32_1 = arith.constant 0 : i32
    %c0_i32_2 = arith.constant 0 : i32
    return %arg0, %c0_i32, %c0_i32_0, %c0_i32_1 : i32, i32, i32, i32
  }
  func.func @transform_1(%arg0: i32, %arg1: i32) -> (i32, i32, i32, i32) {
    %c0_i32 = arith.constant 0 : i32
    %c0_i32_0 = arith.constant 0 : i32
    %c0_i32_1 = arith.constant 0 : i32
    return %arg0, %arg1, %c0_i32, %c0_i32_0 : i32, i32, i32, i32
  }
}

</mosaic_0001>

<llo_original>
// kernel: maxpool2d_static_same.1
$region0: #{maxpool2d_static_same.1}
  #allocation0 [shape = 'u32[]', space=smem, size = 0x4, offset = 0x4, fixed_abs, tag = 'smem constant byte address 0x4 - core index']
  #allocation1 [shape = 'u32[72,128]{1,0:T(1,128)}', space=vmem, size = 0x9000, scoped, tag = 'internal scratch']
  #allocation2 [shape = 'f32[5,17,128]{2,1,0:T(8,128)}', space=vmem, size = 0xf000, scoped, tag = 'scratch operand']
  #allocation3 [shape = 'f32[2,17,128]{2,1,0:T(8,128)}', space=vmem, size = 0x6000, scoped, tag = 'scratch operand']
  %s0 = inlined_call_operand.hbm [shape: f32[2,16,16,128], index: 0, kind: input, shape index: {}]
  %s1 = inlined_call_operand.hbm [shape: f32[2,8,8,128], index: 1, kind: output, shape index: {}]
  %s2 = sld [smem:[#allocation0]]
  $region45: #{maxpool2d_static_same.1} parent=0
    _
  %s4 = ssub.s32 1, %s2
  %s5 = scalar_select 0, %s4, %s2
  $region1: #{maxpool2d_static_same.1} parent=0
    #allocation4 [shape = 'u8[262144]{0}', space=vmem, size = 0x40000, scoped, tag = 'input window, operand 0']
    #allocation5 [shape = 's32[2]{0}', space=sflag, size = 0x8, scoped, tag = 'scoped memory for maxpool2d_static_same.1']
    #allocation6 [shape = 's32[2]{0}', space=sflag, size = 0x8, scoped, tag = 'scoped memory for maxpool2d_static_same.1']
    #allocation7 [shape = 'u8[16384]{0}', space=vmem, size = 0x4000, scoped, tag = 'output window, operand 0']
    %6 = vsyncpa [#allocation5], 0
    %s7 = scalar_lea.sflag [#allocation5], 1
    %8 = vsyncpa %s7, 0
    %9 = vsyncpa [#allocation6], 0
    %s10 = scalar_lea.sflag [#allocation6], 1
    %11 = vsyncpa %s10, 0
    loop: start=0, step=1, limit=10
    $region2: #{maxpool2d_static_same.1} parent=1 // loop_pre_header
      _
    $region3: #{maxpool2d_static_same.1} parent=1 // loop_header
      %s13 = sphi 0, %s17
      %p14 = scmp.ge.s32.totalorder %s13, 10
      %s20 = sphi 0, %s32
      %s21 = sphi 0, %s28
      %s22 = sphi 0, %s20
      %s23 = sphi 0, %s21
      %s24 = sphi 0, %s22
      %s25 = sphi 0, %s23
      %s35 = sphi 0, %s37
      %s38 = sphi 0, %s35
      %s39 = sphi 0, %s38
      %s55 = sphi 0, %s39
      %s63 = sphi 0, %s65
      %s66 = sphi 0, %s63
      %s67 = sphi 0, %s66
      %s83 = sphi 0, %s67
    $region4: #{maxpool2d_static_same.1} parent=1 // loop_header_branch
      %16 = sbr.rel (%p14) target = $region8
    $region5: #{maxpool2d_static_same.1} parent=1 // loop_body
      %s18 = ssub.s32 %s13, 1
      %s19 = ssub.s32 %s13, 2
      %s26 = sadd.s32 1, %s21
      %p27 = scmp.ge.s32.totalorder %s26, 4
      %s28 = scalar_select %p27, 0, %s26
      %s29 = sadd.s32 1, %s20
      %s30 = scalar_select %p27, %s29, %s20
      %p31 = scmp.ge.s32.totalorder %s30, 2
      %s32 = scalar_select %p31, 0, %s30
      %s33 = ssub.s32 %s20, %s32
      %p34 = scmp.eq.s32.totalorder %s33, 0
      %s36 = sadd.s32 %s35, 1
      %s37 = scalar_select %p34, %s35, %s36
      %p40 = pneg %p34
      %p41 = scmp.eq.s32.totalorder %s13, 7
      %p42 = por %p40, %p41
      %p43 = scmp.ne.s32.totalorder %s35, %s38
      %p44 = scmp.eq.s32.totalorder %s13, 0
      %p45 = por %p43, %p44
      %p46 = scmp.ne.s32.totalorder %s35, %s38
      %p47 = scmp.eq.s32.totalorder %s18, 7
      %p48 = por %p46, %p47
      %p49 = scmp.ne.s32.totalorder %s38, %s39
      %p50 = scmp.eq.s32.totalorder %s18, 0
      %p51 = por %p49, %p50
      %p52 = scmp.ne.s32.totalorder %s38, %s39
      %p53 = scmp.eq.s32.totalorder %s19, 7
      %p54 = por %p52, %p53
      %p56 = scmp.ne.s32.totalorder %s39, %s55
      %p57 = scmp.eq.s32.totalorder %s19, 0
      %p58 = por %p56, %p57
      %s59 = ssub.s32 %s20, %s32
      %s60 = ssub.s32 %s21, %s28
      %s61 = sor.u32 %s59, %s60
      %p62 = scmp.eq.s32.totalorder %s61, 0
      %s64 = sadd.s32 %s63, 1
      %s65 = scalar_select %p62, %s63, %s64
      %p68 = pneg %p62
      %p69 = scmp.eq.s32.totalorder %s13, 7
      %p70 = por %p68, %p69
      %p71 = scmp.ne.s32.totalorder %s63, %s66
      %p72 = scmp.eq.s32.totalorder %s13, 0
      %p73 = por %p71, %p72
      %p74 = scmp.ne.s32.totalorder %s63, %s66
      %p75 = scmp.eq.s32.totalorder %s18, 7
      %p76 = por %p74, %p75
      %p77 = scmp.ne.s32.totalorder %s66, %s67
      %p78 = scmp.eq.s32.totalorder %s18, 0
      %p79 = por %p77, %p78
      %p80 = scmp.ne.s32.totalorder %s66, %s67
      %p81 = scmp.eq.s32.totalorder %s19, 7
      %p82 = por %p80, %p81
      %p84 = scmp.ne.s32.totalorder %s67, %s83
      %p85 = scmp.eq.s32.totalorder %s19, 0
      %p86 = por %p84, %p85
      %p87 = scmp.le.s32.totalorder 1, %s13
      %p88 = scmp.lt.s32.totalorder %s13, 9
      %p89 = pnand %p87, %p88
      %p90 = pneg %p89
      // Predicated region
      $region9: #{maxpool2d_static_same.1} parent=5 // pred_check
        _
      $region10: #{maxpool2d_static_same.1} parent=5 // pred_check_branch
        %92 = sbr.rel (%p89) target = $region12
      $region11: #{maxpool2d_static_same.1} parent=5 // pred_region
        %s93 = ssub.s32 %s13, 1
      $region12: #{maxpool2d_static_same.1} parent=5 // pred_fallthru
        _
      %p94 = scmp.lt.s32.totalorder %s13, 8
      // Predicated region
      $region13: #{maxpool2d_static_same.1} parent=5 // pred_check
        %p95 = pneg %p94
      $region14: #{maxpool2d_static_same.1} parent=5 // pred_check_branch
        %97 = sbr.rel (%p95) target = $region16
      $region15: #{maxpool2d_static_same.1} parent=5 // pred_region
        // Predicated region
        $region17: #{maxpool2d_static_same.1} parent=15 // pred_check
          %p98 = pneg %p45
        $region18: #{maxpool2d_static_same.1} parent=15 // pred_check_branch
          %100 = sbr.rel (%p98) target = $region20
        $region19: #{maxpool2d_static_same.1} parent=15 // pred_region
          %s101 = sand.u32 %s35, 1
          %s102 = scalar_lea.sflag [#allocation5], %s101
          %s103 = sand.u32 %s35, 1
          %s104 = smul.addr %s103, 256
          %s105 = scalar_lea.vmem [#allocation4], %s104
          %107 = vsyncadd %s102, 0
          %s108 = smul.addr %s20, 32
          %s109 = smul.addr %s108, 8
          %s110 = scalar_lea.hbm %s0, %s109
          %s111 = sshll.u32 %s110, 4
          %s112 = int_to_ptr.hbm [resolvable:$true] %s111
          %s113 = sshll.u32 %s105, 4
          %s114 = int_to_ptr.vmem [resolvable:$true] %s113
          %119 = dma.hbm_to_vmem [thread:$0]  %s112, 4096, %s114, %s102, 128, 128, 8
        $region20: #{maxpool2d_static_same.1} parent=15 // pred_fallthru
          _
      $region16: #{maxpool2d_static_same.1} parent=5 // pred_fallthru
        _
      %p120 = scmp.le.s32.totalorder 1, %s13
      %p121 = scmp.lt.s32.totalorder %s13, 9
      %p122 = pnand %p120, %p121
      %p123 = pneg %p122
      // Predicated region
      $region21: #{maxpool2d_static_same.1} parent=5 // pred_check
        _
      $region22: #{maxpool2d_static_same.1} parent=5 // pred_check_branch
        %125 = sbr.rel (%p122) target = $region24
      $region23: #{maxpool2d_static_same.1} parent=5 // pred_region
        %s126 = ssub.s32 %s13, 1
        %s127 = sand.u32 %s38, 1
        %s128 = scalar_lea.sflag [#allocation5], %s127
        %s129 = sand.u32 %s38, 1
        %s130 = smul.addr %s129, 256
        %s131 = scalar_lea.vmem [#allocation4], %s130
        // Predicated region
        $region25: #{maxpool2d_static_same.1} parent=23 // pred_check
          %p132 = pneg %p51
        $region26: #{maxpool2d_static_same.1} parent=23 // pred_check_branch
          %134 = sbr.rel (%p132) target = $region28
        $region27: #{maxpool2d_static_same.1} parent=23 // pred_region
          %136 = dma.done %s128, 4096
        $region28: #{maxpool2d_static_same.1} parent=23 // pred_fallthru
          _
        %s137 = sand.u32 %s38, 1
        %s138 = scalar_lea.sflag [#allocation5], %s137
        %s139 = sand.u32 %s38, 1
        %s140 = smul.addr %s139, 256
        %s141 = scalar_lea.vmem [#allocation4], %s140
        %p142 = pneg %p51
        %p143 = pneg %p48
        %p144 = pneg %p79
        %p145 = pneg %p76
        %s146 = sand.u32 %s66, 1
        %s147 = scalar_lea.sflag [#allocation6], %s146
        %s148 = sand.u32 %s66, 1
        %s149 = smul.addr %s148, 16
        %s150 = scalar_lea.vmem [#allocation7], %s149
        %s151 = smul.u32 2, %s23
        %s152 = smul.u32 %s23, 4
        %153 = vst [vmem:[#allocation2] sm:$0xff] 0.0
        %154 = vst [vmem:[#allocation2 + $0x8] sm:$0xff] 0.0
        %155 = vst [vmem:[#allocation2 + $0x10] sm:$0x1] 0.0
        %156 = vst [vmem:[#allocation2 + $0x18] sm:$0xff] 0.0
        %157 = vst [vmem:[#allocation2 + $0x20] sm:$0xff] 0.0
        %158 = vst [vmem:[#allocation2 + $0x28] sm:$0x1] 0.0
        %159 = vst [vmem:[#allocation2 + $0x30] sm:$0xff] 0.0
        %160 = vst [vmem:[#allocation2 + $0x38] sm:$0xff] 0.0
        %161 = vst [vmem:[#allocation2 + $0x40] sm:$0x1] 0.0
        %162 = vst [vmem:[#allocation2 + $0x48] sm:$0xff] 0.0
        %163 = vst [vmem:[#allocation2 + $0x50] sm:$0xff] 0.0
        %164 = vst [vmem:[#allocation2 + $0x58] sm:$0x1] 0.0
        %165 = vst [vmem:[#allocation2 + $0x60] sm:$0xff] 0.0
        %166 = vst [vmem:[#allocation2 + $0x68] sm:$0xff] 0.0
        %167 = vst [vmem:[#allocation2 + $0x70] sm:$0x1] 0.0
        %s168 = smul.u32 %s152, 16
        %s169 = scalar_lea.vmem %s131, %s168 [#allocation4]
        %v170 = vld [vmem:[%s169] sm:$0xff]
        %v171 = vld [vmem:[%s169 + $0x8] sm:$0xff]
        %v172 = vld [vmem:[%s169 + $0x10] sm:$0xff]
        %v173 = vld [vmem:[%s169 + $0x18] sm:$0xff]
        %v174 = vld [vmem:[%s169 + $0x20] sm:$0xff]
        %v175 = vld [vmem:[%s169 + $0x28] sm:$0xff]
        %v176 = vld [vmem:[%s169 + $0x30] sm:$0xff]
        %v177 = vld [vmem:[%s169 + $0x38] sm:$0xff]
        %178 = vst [vmem:[#allocation2] sm:$0xff] %v170
        %179 = vst [vmem:[#allocation2 + $0x8] sm:$0xff] %v171
        %180 = vst [vmem:[#allocation2 + $0x18] sm:$0xff] %v172
        %181 = vst [vmem:[#allocation2 + $0x20] sm:$0xff] %v173
        %182 = vst [vmem:[#allocation2 + $0x30] sm:$0xff] %v174
        %183 = vst [vmem:[#allocation2 + $0x38] sm:$0xff] %v175
        %184 = vst [vmem:[#allocation2 + $0x48] sm:$0xff] %v176
        %185 = vst [vmem:[#allocation2 + $0x50] sm:$0xff] %v177
        %p186 = scmp.lt.s32.totalorder %s23, 3
        // Predicated region
        $region29: #{maxpool2d_static_same.1} parent=23 // pred_check
          %p187 = pneg %p186
        $region30: #{maxpool2d_static_same.1} parent=23 // pred_check_branch
          %189 = sbr.rel (%p187) target = $region32
        $region31: #{maxpool2d_static_same.1} parent=23 // pred_region
          %s190 = sadd.s32 %s152, 4
          %s191 = smul.u32 %s190, 16
          %s192 = scalar_lea.vmem %s131, %s191 [#allocation4]
          %v193 = vld [vmem:[%s192] sm:$0xff]
          %v194 = vld [vmem:[%s192 + $0x8] sm:$0xff]
          %s195 = scalar_lea.vmem [#allocation2], 96
          %196 = vst [vmem:[%s195] sm:$0xff] %v193
          %197 = vst [vmem:[%s195 + $0x8] sm:$0xff] %v194
        $region32: #{maxpool2d_static_same.1} parent=23 // pred_fallthru
          _
        %v198 = vld [vmem:[#allocation2] sm:$0xff]
        %v199 = vld [vmem:[#allocation2 + $0x8] sm:$0xff]
        %v200 = vld [vmem:[#allocation2 + $0x10] sm:$0x1]
        %v201 = vld [vmem:[#allocation2 + $0x30] sm:$0xff]
        %v202 = vld [vmem:[#allocation2 + $0x38] sm:$0xff]
        %v203 = vld [vmem:[#allocation2 + $0x40] sm:$0x1]
        %s204 = scalar_lea.vmem [#allocation2], 24
        %v205 = vld [vmem:[%s204] sm:$0xff]
        %v206 = vld [vmem:[%s204 + $0x8] sm:$0xff]
        %v207 = vld [vmem:[%s204 + $0x10] sm:$0x1]
        %v208 = vld [vmem:[%s204 + $0x30] sm:$0xff]
        %v209 = vld [vmem:[%s204 + $0x38] sm:$0xff]
        %v210 = vld [vmem:[%s204 + $0x40] sm:$0x1]
        %v211 = vmax.f32 %v198, %v205
        %v212 = vmax.f32 %v199, %v206
        %v213 = vmax.f32 %v200, %v207
        %v214 = vmax.f32 %v201, %v208
        %v215 = vmax.f32 %v202, %v209
        %v216 = vmax.f32 %v203, %v210
        %s217 = scalar_lea.vmem [#allocation2], 48
        %v218 = vld [vmem:[%s217] sm:$0xff]
        %v219 = vld [vmem:[%s217 + $0x8] sm:$0xff]
        %v220 = vld [vmem:[%s217 + $0x10] sm:$0x1]
        %v221 = vld [vmem:[%s217 + $0x30] sm:$0xff]
        %v222 = vld [vmem:[%s217 + $0x38] sm:$0xff]
        %v223 = vld [vmem:[%s217 + $0x40] sm:$0x1]
        %v224 = vmax.f32 %v211, %v218
        %v225 = vmax.f32 %v212, %v219
        %v226 = vmax.f32 %v213, %v220
        %v227 = vmax.f32 %v214, %v221
        %v228 = vmax.f32 %v215, %v222
        %v229 = vmax.f32 %v216, %v223
        %230 = vst [vmem:[#allocation3] sm:$0xff] %v224
        %231 = vst [vmem:[#allocation3 + $0x8] sm:$0xff] %v225
        %232 = vst [vmem:[#allocation3 + $0x10] sm:$0x1] %v226
        %233 = vst [vmem:[#allocation3 + $0x18] sm:$0xff] %v227
        %234 = vst [vmem:[#allocation3 + $0x20] sm:$0xff] %v228
        %235 = vst [vmem:[#allocation3 + $0x28] sm:$0x1] %v229
        %v236 = vld [vmem:[#allocation3] ss:$2 sm:$0xff]
        %s237 = scalar_lea.vmem [#allocation3], 24
        %v238 = vld [vmem:[%s237] ss:$2 sm:$0xff]
        %s239 = scalar_lea.vmem [#allocation3], 1
        %v240 = vld [vmem:[%s239] ss:$2 sm:$0xff]
        %s241 = scalar_lea.vmem [#allocation3], 25
        %v242 = vld [vmem:[%s241] ss:$2 sm:$0xff]
        %v243 = vmax.f32 %v236, %v240
        %v244 = vmax.f32 %v238, %v242
        %s245 = scalar_lea.vmem [#allocation3], 2
        %v246 = vld [vmem:[%s245] ss:$2 sm:$0xff]
        %s247 = scalar_lea.vmem [#allocation3], 26
        %v248 = vld [vmem:[%s247] ss:$2 sm:$0xff]
        %v249 = vmax.f32 %v243, %v246
        %v250 = vmax.f32 %v244, %v248
        %251 = vst [vmem:[%s150] sm:$0xff] %v249
        %252 = vst [vmem:[%s150 + $0x8] sm:$0xff] %v250
        %s253 = sand.u32 %s66, 1
        %s254 = scalar_lea.sflag [#allocation6], %s253
        %s255 = sand.u32 %s66, 1
        %s256 = smul.addr %s255, 16
        %s257 = scalar_lea.vmem [#allocation7], %s256
        // Predicated region
        $region33: #{maxpool2d_static_same.1} parent=23 // pred_check
          %p258 = pneg %p76
        $region34: #{maxpool2d_static_same.1} parent=23 // pred_check_branch
          %260 = sbr.rel (%p258) target = $region36
        $region35: #{maxpool2d_static_same.1} parent=23 // pred_region
          %s261 = smul.u32 2, %s23
          %263 = vsyncadd %s254, 0
          %s264 = smul.addr %s22, 8
          %s265 = sadd.s32 %s261, %s264
          %s266 = smul.addr %s265, 8
          %s267 = scalar_lea.hbm %s1, %s266
          %s268 = sshll.u32 %s257, 4
          %s269 = int_to_ptr.vmem [resolvable:$true] %s268
          %s270 = sshll.u32 %s267, 4
          %s271 = int_to_ptr.hbm [resolvable:$true] %s270
          %276 = dma.vmem_to_hbm [thread:$0]  %s269, 256, %s271, %s254, 128, 128, 8
        $region36: #{maxpool2d_static_same.1} parent=23 // pred_fallthru
          _
      $region24: #{maxpool2d_static_same.1} parent=5 // pred_fallthru
        _
      %p277 = scmp.le.s32.totalorder 2, %s13
      // Predicated region
      $region37: #{maxpool2d_static_same.1} parent=5 // pred_check
        %p278 = pneg %p277
      $region38: #{maxpool2d_static_same.1} parent=5 // pred_check_branch
        %280 = sbr.rel (%p278) target = $region40
      $region39: #{maxpool2d_static_same.1} parent=5 // pred_region
        %s281 = ssub.s32 %s13, 2
        // Predicated region
        $region41: #{maxpool2d_static_same.1} parent=39 // pred_check
          %p282 = pneg %p82
        $region42: #{maxpool2d_static_same.1} parent=39 // pred_check_branch
          %284 = sbr.rel (%p282) target = $region44
        $region43: #{maxpool2d_static_same.1} parent=39 // pred_region
          %s285 = sand.u32 %s67, 1
          %s286 = scalar_lea.sflag [#allocation6], %s285
          %s287 = sand.u32 %s67, 1
          %s288 = smul.addr %s287, 16
          %s289 = scalar_lea.vmem [#allocation7], %s288
          %291 = dma.done %s286, 256
        $region44: #{maxpool2d_static_same.1} parent=39 // pred_fallthru
          _
      $region40: #{maxpool2d_static_same.1} parent=5 // pred_fallthru
        _
    $region6: #{maxpool2d_static_same.1} parent=1 // loop_footer
      %s17 = sadd.s32 1, %s13
    $region7: #{maxpool2d_static_same.1} parent=1 // loop_footer_branch
      %12 = sbr.rel target = $region3
    $region8: #{maxpool2d_static_same.1} parent=1 // loop_exit
      _
    %292 = vsyncpa [#allocation5], 1
    %s293 = scalar_lea.sflag [#allocation5], 1
    %294 = vsyncpa %s293, 1
    %295 = vsyncpa [#allocation6], 1
    %s296 = scalar_lea.sflag [#allocation6], 1
    %297 = vsyncpa %s296, 1

</llo_original>
